<compile_context>
chip_gen: v7x
topology: tpu7x:2x2x1
jax: 0.10.0
libtpu: 0.0.40
codegen_flags: <defaults>
</compile_context>

<pallas_src>
import jax
import jax.numpy as jnp
from jax.experimental import pallas as pl
from jax.experimental.pallas import tpu as pltpu


def _round_up(x, m):
    return ((x + m - 1) // m) * m


def _user_session_kernel(idc_ref, idr_ref, sim_ref, user_tile_ref, user_bf16_ref,
                         wva_ref, w1b_ref, b_ref, out_ref):
    sim_row = sim_ref[...]                                                # (1, N)

    # ---- same-group mask for this row tile ------------------------------------------
    same = idc_ref[...] == idr_ref[...]          # (T,1)==(1,N) -> (T,N) bool

    # group max as seen by each tile row (every row is a member of its own group)
    gmax = jnp.max(jnp.where(same, sim_row, -jnp.inf), axis=1, keepdims=True)   # (T,1)
    # per-column group max; columns not touching any tile group fall back to their own
    # sim value so everything stays finite (they are masked out below anyway)
    gcol = jnp.max(jnp.where(same, gmax, sim_row), axis=0, keepdims=True)       # (1,N)

    # only N exponentials (EUP) instead of T*N; arguments are <= 0
    ep = jnp.exp(sim_row - gcol)                                          # (1, N)
    e = jnp.where(same, ep, 0.0)                                          # (T, N)
    denom = jnp.sum(e, axis=1, keepdims=True)                             # (T, 1)
    # denom >= 1 (the arg-max column contributes exp(0)=1) -> approx reciprocal is safe
    inv_denom = pl.reciprocal(denom, approx=True)

    # group aggregation: (T,N)@(N,H) in bf16 with f32 accumulation, scale afterwards
    gw = jnp.dot(e.astype(jnp.bfloat16), user_bf16_ref[...],
                 preferred_element_type=jnp.float32) * inv_denom          # (T, H)

    # value path folded with the first half of Linear(2H->H):
    #   relu(user @ (Wv W1a^T) + gw @ W1b^T + b)
    h = (jnp.dot(user_tile_ref[...], wva_ref[...], preferred_element_type=jnp.float32)
         + jnp.dot(gw, w1b_ref[...], preferred_element_type=jnp.float32)
         + b_ref[...])
    out_ref[...] = jnp.maximum(h, 0.0)


def user_session_sim_net(sess_embed, user_embed, user_ids, params, *, tile=256):
    """Pallas forward. sess_embed/user_embed: (N, H) f32, user_ids: (N,) int."""
    n, h = sess_embed.shape
    wq, wk, wv, w1, b1 = (params["Wq"], params["Wk"], params["Wv"],
                          params["W1"], params["b1"])

    # ---- pad rows so the grid divides exactly; padded rows get unique group ids ----
    tile = min(tile, _round_up(n, 8))
    n_pad = _round_up(n, tile)
    pad = n_pad - n

    ids = user_ids.astype(jnp.int32)
    sess = sess_embed
    user = user_embed
    if pad:
        sess = jnp.pad(sess, ((0, pad), (0, 0)))
        user = jnp.pad(user, ((0, pad), (0, 0)))
        pad_ids = jnp.max(ids) + 1 + jnp.arange(pad, dtype=jnp.int32)
        ids = jnp.concatenate([ids, pad_ids])

    ids_col = ids.reshape(n_pad, 1)
    ids_row = ids.reshape(1, n_pad)
    user_bf16 = user.astype(jnp.bfloat16)     # bf16 operand of the (T,N)@(N,H) matmul

    # Similarity computed ONCE (not per tile): sim = rowsum((user @ Wq Wk^T) * sess).
    # This is a grid invariant; recomputing it per tile was redundant MXU work.
    wqk = jnp.dot(wq, wk.T)
    sim_row = jnp.sum(jnp.dot(user, wqk) * sess, axis=1).reshape(1, n_pad)

    # Fold Wv with the first half of nn.Linear(2H, H):
    #   hidden = [v, gw] @ W1.T + b1 = user @ (Wv W1a^T) + gw @ W1b^T + b1
    wva = jnp.dot(wv, jnp.transpose(w1[:, :h]))          # (H, H)
    w1b_t = jnp.transpose(w1[:, h:])                     # (H, H)
    b_row = b1.reshape(1, h)

    grid = (n_pad // tile,)
    out = pl.pallas_call(
        _user_session_kernel,
        out_shape=jax.ShapeDtypeStruct((n_pad, h), jnp.float32),
        grid=grid,
        in_specs=[
            pl.BlockSpec((tile, 1), lambda i: (i, 0)),     # ids column, per tile
            pl.BlockSpec((1, n_pad), lambda i: (0, 0)),    # ids row, resident
            pl.BlockSpec((1, n_pad), lambda i: (0, 0)),    # sim row, resident
            pl.BlockSpec((tile, h), lambda i: (i, 0)),     # user rows (f32), per tile
            pl.BlockSpec((n_pad, h), lambda i: (0, 0)),    # user (bf16), resident
            pl.BlockSpec((h, h), lambda i: (0, 0)),        # Wv @ W1[:, :H]^T
            pl.BlockSpec((h, h), lambda i: (0, 0)),        # W1[:, H:]^T
            pl.BlockSpec((1, h), lambda i: (0, 0)),        # bias row
        ],
        out_specs=pl.BlockSpec((tile, h), lambda i: (i, 0)),
        compiler_params=pltpu.CompilerParams(
            dimension_semantics=("parallel",)),            # megacore sharding
    )(ids_col, ids_row, sim_row, user, user_bf16, wva, w1b_t, b_row)

    return out[:n] if pad else out


def _reference(sess_embed, user_embed, user_ids, params):
    """Pure-JAX reference mirroring the PyTorch scatter_* semantics (all f32)."""
    wq, wk, wv, w1, b1 = (params["Wq"], params["Wk"], params["Wv"],
                          params["W1"], params["b1"])
    q = user_embed @ wq
    k = sess_embed @ wk
    v = user_embed @ wv
    sim = jnp.sum(q * k, axis=1)
    num_seg = int(jnp.max(user_ids)) + 1
    gmax = jax.ops.segment_max(sim, user_ids, num_segments=num_seg)
    e = jnp.exp(sim - gmax[user_ids])
    denom = jax.ops.segment_sum(e, user_ids, num_segments=num_seg)
    sim_sm = e / denom[user_ids]
    weighted_sum = jax.ops.segment_sum(user_embed * sim_sm[:, None], user_ids,
                                       num_segments=num_seg)
    concat = jnp.concatenate([v, weighted_sum[user_ids]], axis=1)
    return jax.nn.relu(concat @ w1.T + b1)


if __name__ == "__main__":
    N, H = 8, 32
    key = jax.random.PRNGKey(0)
    k_sess, k_user, k_wq, k_wk, k_wv, k_w1, k_b1 = jax.random.split(key, 7)

    sess_embed = jax.random.normal(k_sess, (N, H), dtype=jnp.float32)
    user_embed = jax.random.normal(k_user, (N, H), dtype=jnp.float32)
    user_ids = jnp.array([0, 0, 0, 1, 1, 2, 2, 3], dtype=jnp.int32)

    params = {
        "Wq": jax.random.normal(k_wq, (H, H), dtype=jnp.float32) * 0.1,
        "Wk": jax.random.normal(k_wk, (H, H), dtype=jnp.float32) * 0.1,
        "Wv": jax.random.normal(k_wv, (H, H), dtype=jnp.float32) * 0.1,
        # nn.Linear(2H, H): weight (H, 2H), bias (H,)
        "W1": jax.random.normal(k_w1, (H, 2 * H), dtype=jnp.float32) * 0.1,
        "b1": jax.random.normal(k_b1, (H,), dtype=jnp.float32) * 0.1,
    }

    out = user_session_sim_net(sess_embed, user_embed, user_ids, params)
    out = jax.block_until_ready(out)

    ref = _reference(sess_embed, user_embed, user_ids, params)
    assert out.shape == (N, H)
    # bf16 aggregation matmul + approx reciprocal -> tolerance relaxed vs pure f32.
    assert jnp.allclose(out, ref, atol=5e-2, rtol=5e-2), "mismatch vs reference"
    print("KERNEL_OK")
</pallas_src>

<mosaic_0001>
module attributes {stable_mosaic.version = 11 : i64} {
  func.func @_user_session_kernel(%arg0: i32, %arg1: memref<8x1xi32, #tpu.memory_space<vmem>>, %arg2: memref<1x8xi32, #tpu.memory_space<vmem>>, %arg3: memref<1x8xf32, #tpu.memory_space<vmem>>, %arg4: memref<8x32xf32, #tpu.memory_space<vmem>>, %arg5: memref<8x32xbf16, #tpu.memory_space<vmem>>, %arg6: memref<32x32xf32, #tpu.memory_space<vmem>>, %arg7: memref<32x32xf32, #tpu.memory_space<vmem>>, %arg8: memref<1x32xf32, #tpu.memory_space<vmem>>, %arg9: memref<8x32xf32, #tpu.memory_space<vmem>>) attributes {dimension_semantics = [#tpu.dimension_semantics<parallel>], iteration_bounds = array<i64: 1>, scalar_prefetch = 0 : i64, scratch_operands = 0 : i64, tpu.core_type = #tpu.core_type<tc>, window_params = [{transform_indices = @transform_0, window_bounds = array<i64: 8, 1>}, {pipeline_mode = #tpu.pipeline_mode<synchronous>, transform_indices = @transform_1, window_bounds = array<i64: 1, 8>}, {pipeline_mode = #tpu.pipeline_mode<synchronous>, transform_indices = @transform_2, window_bounds = array<i64: 1, 8>}, {transform_indices = @transform_3, window_bounds = array<i64: 8, 32>}, {pipeline_mode = #tpu.pipeline_mode<synchronous>, transform_indices = @transform_4, window_bounds = array<i64: 8, 32>}, {pipeline_mode = #tpu.pipeline_mode<synchronous>, transform_indices = @transform_5, window_bounds = array<i64: 32, 32>}, {pipeline_mode = #tpu.pipeline_mode<synchronous>, transform_indices = @transform_6, window_bounds = array<i64: 32, 32>}, {pipeline_mode = #tpu.pipeline_mode<synchronous>, transform_indices = @transform_7, window_bounds = array<i64: 1, 32>}, {transform_indices = @transform_8, window_bounds = array<i64: 8, 32>}]} {
    %c0 = arith.constant 0 : index
    %c0_0 = arith.constant 0 : index
    %0 = vector.load %arg3[%c0, %c0_0] : memref<1x8xf32, #tpu.memory_space<vmem>>, vector<1x8xf32>
    %c0_1 = arith.constant 0 : index
    %c0_2 = arith.constant 0 : index
    %1 = vector.load %arg1[%c0_1, %c0_2] : memref<8x1xi32, #tpu.memory_space<vmem>>, vector<8x1xi32>
    %c0_3 = arith.constant 0 : index
    %c0_4 = arith.constant 0 : index
    %2 = vector.load %arg2[%c0_3, %c0_4] : memref<1x8xi32, #tpu.memory_space<vmem>>, vector<1x8xi32>
    %3 = vector.broadcast %1 : vector<8x1xi32> to vector<8x8xi32>
    %4 = vector.broadcast %2 : vector<1x8xi32> to vector<8x8xi32>
    %5 = arith.cmpi eq, %3, %4 : vector<8x8xi32>
    %cst = arith.constant 0xFF800000 : f32
    %6 = vector.shape_cast %0 : vector<1x8xf32> to vector<1x8xf32>
    %7 = vector.broadcast %6 : vector<1x8xf32> to vector<8x8xf32>
    %8 = vector.broadcast %cst : f32 to vector<8x8xf32>
    %9 = arith.select %5, %7, %8 : vector<8x8xi1>, vector<8x8xf32>
    %cst_5 = arith.constant dense<0xFF800000> : vector<8xf32>
    %10 = vector.multi_reduction <maximumf>, %9, %cst_5 [1] : vector<8x8xf32> to vector<8xf32>
    %11 = vector.shape_cast %10 : vector<8xf32> to vector<8x1xf32>
    %12 = vector.shape_cast %11 : vector<8x1xf32> to vector<8x1xf32>
    %13 = vector.broadcast %12 : vector<8x1xf32> to vector<8x8xf32>
    %14 = vector.shape_cast %0 : vector<1x8xf32> to vector<1x8xf32>
    %15 = vector.broadcast %14 : vector<1x8xf32> to vector<8x8xf32>
    %16 = arith.select %5, %13, %15 : vector<8x8xi1>, vector<8x8xf32>
    %cst_6 = arith.constant dense<0xFF800000> : vector<8xf32>
    %17 = vector.multi_reduction <maximumf>, %16, %cst_6 [0] : vector<8x8xf32> to vector<8xf32>
    %18 = vector.shape_cast %17 : vector<8xf32> to vector<1x8xf32>
    %19 = arith.subf %0, %18 : vector<1x8xf32>
    %20 = math.exp %19 : vector<1x8xf32>
    %cst_7 = arith.constant 0.000000e+00 : f32
    %21 = vector.shape_cast %20 : vector<1x8xf32> to vector<1x8xf32>
    %22 = vector.broadcast %21 : vector<1x8xf32> to vector<8x8xf32>
    %23 = vector.broadcast %cst_7 : f32 to vector<8x8xf32>
    %24 = arith.select %5, %22, %23 : vector<8x8xi1>, vector<8x8xf32>
    %cst_8 = arith.constant dense<0.000000e+00> : vector<8xf32>
    %25 = vector.multi_reduction <add>, %24, %cst_8 [1] : vector<8x8xf32> to vector<8xf32>
    %26 = vector.shape_cast %25 : vector<8xf32> to vector<8x1xf32>
    %27 = tpu.reciprocal %26 {approx = true} : vector<8x1xf32> -> vector<8x1xf32>
    %28 = arith.truncf %24 : vector<8x8xf32> to vector<8x8xbf16>
    %c0_9 = arith.constant 0 : index
    %c0_10 = arith.constant 0 : index
    %29 = vector.load %arg5[%c0_9, %c0_10] : memref<8x32xbf16, #tpu.memory_space<vmem>>, vector<8x32xbf16>
    %cst_11 = arith.constant dense<0.000000e+00> : vector<8x32xf32>
    %30 = tpu.matmul %28, %29, %cst_11 {dimension_numbers = #tpu.dot_dimension_numbers<[1], [0], [0], [1], [0, 0, 1, 1], [], []>} : vector<8x8xbf16>, vector<8x32xbf16>, vector<8x32xf32> -> vector<8x32xf32>
    %31 = vector.broadcast %27 : vector<8x1xf32> to vector<8x32xf32>
    %32 = arith.mulf %30, %31 : vector<8x32xf32>
    %c0_12 = arith.constant 0 : index
    %c0_13 = arith.constant 0 : index
    %33 = vector.load %arg4[%c0_12, %c0_13] : memref<8x32xf32, #tpu.memory_space<vmem>>, vector<8x32xf32>
    %c0_14 = arith.constant 0 : index
    %c0_15 = arith.constant 0 : index
    %34 = vector.load %arg6[%c0_14, %c0_15] : memref<32x32xf32, #tpu.memory_space<vmem>>, vector<32x32xf32>
    %cst_16 = arith.constant dense<0.000000e+00> : vector<8x32xf32>
    %35 = tpu.matmul %33, %34, %cst_16 {dimension_numbers = #tpu.dot_dimension_numbers<[1], [0], [0], [1], [0, 0, 1, 1], [], []>} : vector<8x32xf32>, vector<32x32xf32>, vector<8x32xf32> -> vector<8x32xf32>
    %c0_17 = arith.constant 0 : index
    %c0_18 = arith.constant 0 : index
    %36 = vector.load %arg7[%c0_17, %c0_18] : memref<32x32xf32, #tpu.memory_space<vmem>>, vector<32x32xf32>
    %cst_19 = arith.constant dense<0.000000e+00> : vector<8x32xf32>
    %37 = tpu.matmul %32, %36, %cst_19 {dimension_numbers = #tpu.dot_dimension_numbers<[1], [0], [0], [1], [0, 0, 1, 1], [], []>} : vector<8x32xf32>, vector<32x32xf32>, vector<8x32xf32> -> vector<8x32xf32>
    %38 = arith.addf %35, %37 : vector<8x32xf32>
    %c0_20 = arith.constant 0 : index
    %c0_21 = arith.constant 0 : index
    %39 = vector.load %arg8[%c0_20, %c0_21] : memref<1x32xf32, #tpu.memory_space<vmem>>, vector<1x32xf32>
    %40 = vector.broadcast %39 : vector<1x32xf32> to vector<8x32xf32>
    %41 = arith.addf %38, %40 : vector<8x32xf32>
    %cst_22 = arith.constant 0.000000e+00 : f32
    %42 = vector.broadcast %cst_22 : f32 to vector<8x32xf32>
    %43 = arith.maximumf %41, %42 : vector<8x32xf32>
    %c0_23 = arith.constant 0 : index
    %c0_24 = arith.constant 0 : index
    %44 = vector.load %arg9[%c0_23, %c0_24] : memref<8x32xf32, #tpu.memory_space<vmem>>, vector<8x32xf32>
    tpu.vector_store %arg9[%c0_23, %c0_24], %43 {strides = array<i32>} : memref<8x32xf32, #tpu.memory_space<vmem>>, vector<8x32xf32>,
    return
  }
  func.func @transform_0(%arg0: i32) -> (i32, i32) {
    %c0_i32 = arith.constant 0 : i32
    %c0_i32_0 = arith.constant 0 : i32
    return %arg0, %c0_i32 : i32, i32
  }
  func.func @transform_1(%arg0: i32) -> (i32, i32) {
    %c0_i32 = arith.constant 0 : i32
    %c0_i32_0 = arith.constant 0 : i32
    %c0_i32_1 = arith.constant 0 : i32
    return %c0_i32, %c0_i32_0 : i32, i32
  }
  func.func @transform_2(%arg0: i32) -> (i32, i32) {
    %c0_i32 = arith.constant 0 : i32
    %c0_i32_0 = arith.constant 0 : i32
    %c0_i32_1 = arith.constant 0 : i32
    return %c0_i32, %c0_i32_0 : i32, i32
  }
  func.func @transform_3(%arg0: i32) -> (i32, i32) {
    %c0_i32 = arith.constant 0 : i32
    %c0_i32_0 = arith.constant 0 : i32
    return %arg0, %c0_i32 : i32, i32
  }
  func.func @transform_4(%arg0: i32) -> (i32, i32) {
    %c0_i32 = arith.constant 0 : i32
    %c0_i32_0 = arith.constant 0 : i32
    %c0_i32_1 = arith.constant 0 : i32
    return %c0_i32, %c0_i32_0 : i32, i32
  }
  func.func @transform_5(%arg0: i32) -> (i32, i32) {
    %c0_i32 = arith.constant 0 : i32
    %c0_i32_0 = arith.constant 0 : i32
    %c0_i32_1 = arith.constant 0 : i32
    return %c0_i32, %c0_i32_0 : i32, i32
  }
  func.func @transform_6(%arg0: i32) -> (i32, i32) {
    %c0_i32 = arith.constant 0 : i32
    %c0_i32_0 = arith.constant 0 : i32
    %c0_i32_1 = arith.constant 0 : i32
    return %c0_i32, %c0_i32_0 : i32, i32
  }
  func.func @transform_7(%arg0: i32) -> (i32, i32) {
    %c0_i32 = arith.constant 0 : i32
    %c0_i32_0 = arith.constant 0 : i32
    %c0_i32_1 = arith.constant 0 : i32
    return %c0_i32, %c0_i32_0 : i32, i32
  }
  func.func @transform_8(%arg0: i32) -> (i32, i32) {
    %c0_i32 = arith.constant 0 : i32
    %c0_i32_0 = arith.constant 0 : i32
    return %arg0, %c0_i32 : i32, i32
  }
}

</mosaic_0001>

<llo_original>
// kernel: tpu_custom_call.1
$region0: #{tpu_custom_call.1}
  #allocation0 [shape = 'u32[]', space=smem, size = 0x4, offset = 0x4, fixed_abs, tag = 'smem constant byte address 0x4 - core index']
  #allocation1 [shape = 'u32[144,128]{1,0:T(1,128)}', space=vmem, size = 0x12000, scoped, tag = 'internal scratch']
  %s0 = inlined_call_operand.vmem [shape: s32[8,1], index: 0, kind: input, shape index: {}]
  %s1 = inlined_call_operand.vmem [shape: s32[1,8], index: 1, kind: input, shape index: {}]
  %s2 = inlined_call_operand.vmem [shape: f32[1,8], index: 2, kind: input, shape index: {}]
  %s3 = inlined_call_operand.vmem [shape: f32[8,32], index: 3, kind: input, shape index: {}]
  %s4 = inlined_call_operand.vmem [shape: bf16[8,32], index: 4, kind: input, shape index: {}]
  %s5 = inlined_call_operand.hbm [shape: f32[32,32], index: 5, kind: input, shape index: {}]
  %s6 = inlined_call_operand.hbm [shape: f32[32,32], index: 6, kind: input, shape index: {}]
  %s7 = inlined_call_operand.vmem [shape: f32[1,32], index: 7, kind: input, shape index: {}]
  %s8 = inlined_call_operand.hbm [shape: f32[8,32], index: 8, kind: output, shape index: {}]
  %s9 = sld [smem:[#allocation0]]
  $region50: #{tpu_custom_call.1} parent=0
    _
  %s11 = ssub.s32 1, %s9
  %s12 = scalar_select 0, %s11, %s9
  $region1: #{tpu_custom_call.1} parent=0
    #allocation2 [shape = 'u8[16384]{0}', space=vmem, size = 0x4000, scoped, tag = 'input window, operand 5, single buffered']
    #allocation3 [shape = 's32[1]{0}', space=sflag, size = 0x4, scoped, tag = 'scoped memory for tpu_custom_call.1']
    #allocation4 [shape = 's32[1]{0}', space=sflag, size = 0x4, scoped, tag = 'scoped memory for tpu_custom_call.1']
    #allocation5 [shape = 'u8[16384]{0}', space=vmem, size = 0x4000, scoped, tag = 'input window, operand 6, single buffered']
    #allocation6 [shape = 's32[1]{0}', space=sflag, size = 0x4, scoped, tag = 'scoped memory for tpu_custom_call.1']
    #allocation7 [shape = 'u8[4096]{0}', space=vmem, size = 0x1000, scoped, tag = 'output window, operand 0, single buffered']
    %13 = vsyncpa [#allocation3], 0
    %14 = vsyncpa [#allocation6], 0
    %15 = vsyncpa [#allocation4], 0
    // Predicated region
    $region2: #{tpu_custom_call.1} parent=1 // pred_check
      _
    $region3: #{tpu_custom_call.1} parent=1 // pred_check_branch
      %17 = sbr.rel (0) target = $region5
    $region4: #{tpu_custom_call.1} parent=1 // pred_region
      _
    $region5: #{tpu_custom_call.1} parent=1 // pred_fallthru
      _
    // Predicated region
    $region6: #{tpu_custom_call.1} parent=1 // pred_check
      _
    $region7: #{tpu_custom_call.1} parent=1 // pred_check_branch
      %19 = sbr.rel (0) target = $region9
    $region8: #{tpu_custom_call.1} parent=1 // pred_region
      _
    $region9: #{tpu_custom_call.1} parent=1 // pred_fallthru
      _
    // Predicated region
    $region10: #{tpu_custom_call.1} parent=1 // pred_check
      _
    $region11: #{tpu_custom_call.1} parent=1 // pred_check_branch
      %21 = sbr.rel (0) target = $region13
    $region12: #{tpu_custom_call.1} parent=1 // pred_region
      _
    $region13: #{tpu_custom_call.1} parent=1 // pred_fallthru
      _
    // Predicated region
    $region14: #{tpu_custom_call.1} parent=1 // pred_check
      _
    $region15: #{tpu_custom_call.1} parent=1 // pred_check_branch
      %23 = sbr.rel (0) target = $region17
    $region16: #{tpu_custom_call.1} parent=1 // pred_region
      _
    $region17: #{tpu_custom_call.1} parent=1 // pred_fallthru
      _
    // Predicated region
    $region18: #{tpu_custom_call.1} parent=1 // pred_check
      _
    $region19: #{tpu_custom_call.1} parent=1 // pred_check_branch
      %25 = sbr.rel (0) target = $region21
    $region20: #{tpu_custom_call.1} parent=1 // pred_region
      _
    $region21: #{tpu_custom_call.1} parent=1 // pred_fallthru
      _
    // Predicated region
    $region22: #{tpu_custom_call.1} parent=1 // pred_check
      _
    $region23: #{tpu_custom_call.1} parent=1 // pred_check_branch
      %27 = sbr.rel (0) target = $region25
    $region24: #{tpu_custom_call.1} parent=1 // pred_region
      %s29 = ssub.s32 512, 512
      %30 = vsyncadd [#allocation3], %s29
      %s31 = sshll.u32 [#allocation2], 4
      %s32 = int_to_ptr.vmem [resolvable:$true] %s31
      %37 = dma.hbm_to_vmem [thread:$0]  %s5, 512, %s32, [#allocation3], 128, 128, 8
    $region25: #{tpu_custom_call.1} parent=1 // pred_fallthru
      _
    // Predicated region
    $region26: #{tpu_custom_call.1} parent=1 // pred_check
      _
    $region27: #{tpu_custom_call.1} parent=1 // pred_check_branch
      %39 = sbr.rel (0) target = $region29
    $region28: #{tpu_custom_call.1} parent=1 // pred_region
      %s41 = ssub.s32 512, 512
      %42 = vsyncadd [#allocation6], %s41
      %s43 = sshll.u32 [#allocation5], 4
      %s44 = int_to_ptr.vmem [resolvable:$true] %s43
      %49 = dma.hbm_to_vmem [thread:$0]  %s6, 512, %s44, [#allocation6], 128, 128, 8
    $region29: #{tpu_custom_call.1} parent=1 // pred_fallthru
      _
    // Predicated region
    $region30: #{tpu_custom_call.1} parent=1 // pred_check
      _
    $region31: #{tpu_custom_call.1} parent=1 // pred_check_branch
      %51 = sbr.rel (0) target = $region33
    $region32: #{tpu_custom_call.1} parent=1 // pred_region
      _
    $region33: #{tpu_custom_call.1} parent=1 // pred_fallthru
      _
    // Predicated region
    $region34: #{tpu_custom_call.1} parent=1 // pred_check
      _
    $region35: #{tpu_custom_call.1} parent=1 // pred_check_branch
      %53 = sbr.rel (0) target = $region37
    $region36: #{tpu_custom_call.1} parent=1 // pred_region
      %54 = dma.done [#allocation3], 512
    $region37: #{tpu_custom_call.1} parent=1 // pred_fallthru
      _
    // Predicated region
    $region38: #{tpu_custom_call.1} parent=1 // pred_check
      _
    $region39: #{tpu_custom_call.1} parent=1 // pred_check_branch
      %56 = sbr.rel (0) target = $region41
    $region40: #{tpu_custom_call.1} parent=1 // pred_region
      %57 = dma.done [#allocation6], 512
    $region41: #{tpu_custom_call.1} parent=1 // pred_fallthru
      _
    %v59 = vld [vmem:[%s2] sm:$0x1]
    %v60 = vld [vmem:[%s0] sm:$0xff]
    %v61 = vld [vmem:[%s1] sm:$0x1]
    %62 = vset.pattern.permute.xlu0 0
    %63 = vperm.xlu0 %62, %v60
    %v64 = vpop.permute.xlu0 %63
    %v65 = vlaneseq
    %v66 = vshrl.u32 %v65, 7
    %v67 = vsub.s32 0, %v66
    %v68 = vrot.slane %v61, %v67
    %vm69 = vcmp.eq.s32.totalorder %v64, %v68
    %v71 = vlaneseq
    %v72 = vshrl.u32 %v71, 7
    %v73 = vsub.s32 0, %v72
    %v74 = vrot.slane %v59, %v73
    %v76 = vsel %vm69, %v74, -inf
    %vm77 = vcmask 64512
    %v78 = vsel %vm77, %v76, -inf
    %79 = vmax.xlane.f32.xlu0 %v78
    %v80 = vpop.xlane.xlu0 %79
    %v81 = vsel %vm69, %v80, %v74
    %v82 = vsel %vm77, %v81, -inf
    %v83 = vrot.slane %v82, 4
    %v84 = vmax.f32 %v82, %v83
    %v85 = vrot.slane %v84, 2
    %v86 = vmax.f32 %v84, %v85
    %v87 = vrot.slane %v86, 1
    %v88 = vmax.f32 %v86, %v87
    %v89 = vsub.f32 %v59, %v88
    %v90 = vmul.f32 %v89, 1.442695
    %v91 = vpow.pop %v90
    %v93 = vlaneseq
    %v94 = vshrl.u32 %v93, 7
    %v95 = vsub.s32 0, %v94
    %v96 = vrot.slane %v91, %v95
    %v98 = vsel %vm69, %v96, 0.0
    %v99 = vsel %vm77, %v98, 0.0
    %100 = vadd.xlane.f32.xlu0 %v99
    %v101 = vpop.xlane.xlu0 %100
    %v102 = vrcp.pop %v101
    %v103 = vpack.c.bf16 %v98, %v98
    %v104 = vld [vmem:[%s4] sm:$0xf]
    %v106 = vsel %vm77, %v103, 0
    %vm108 = vcmask 1043456
    %v110 = vsel %vm108, %v104, 0
    %112 = vmatprep.subr.bf16.mxu0 0
    %113 = vmatpush1.bf16.msra.mxu0 %v110
    %114 = vmatprep.subr.bf16.mxu0 0
    %115 = vmatpush1.bf16.msra.mxu0 0
    %116 = vmatprep.subr.bf16.mxu0 0
    %117 = vmatpush1.bf16.msra.mxu0 0
    %118 = vmatprep.subr.bf16.mxu0 0
    %119 = vmatpush1.bf16.msra.mxu0 0
    %120 = vmatprep.subr.bf16.mxu0 0
    %121 = vmatpush1.bf16.msra.mxu0 0
    %122 = vmatprep.subr.bf16.mxu0 0
    %123 = vmatpush1.bf16.msra.mxu0 0
    %124 = vmatprep.subr.bf16.mxu0 0
    %125 = vmatpush1.bf16.msra.mxu0 0
    %126 = vmatprep.subr.bf16.mxu0 0
    %127 = vmatpush1.bf16.msra.mxu0 0
    %128 = vmatprep.subr.bf16.mxu0 0
    %129 = vmatpush1.bf16.msra.mxu0 0
    %130 = vmatprep.subr.bf16.mxu0 0
    %131 = vmatpush1.bf16.msra.mxu0 0
    %132 = vmatprep.subr.bf16.mxu0 0
    %133 = vmatpush1.bf16.msra.mxu0 0
    %134 = vmatprep.subr.bf16.mxu0 0
    %135 = vmatpush1.bf16.msra.mxu0 0
    %136 = vmatprep.subr.bf16.mxu0 0
    %137 = vmatpush1.bf16.msra.mxu0 0
    %138 = vmatprep.subr.bf16.mxu0 0
    %139 = vmatpush1.bf16.msra.mxu0 0
    %140 = vmatprep.subr.bf16.mxu0 0
    %141 = vmatpush1.bf16.msra.mxu0 0
    %142 = vmatprep.subr.bf16.mxu0 0
    %143 = vmatpush1.bf16.msra.mxu0 0
    %144 = vmatprep.mubr.bf16.mxu0 0
    %145 = vmatmul.mubr.bf16.gmra.mrb[0].mxu0 %v106
    %v146 = vpop.f32.mrb[0].mxu0
    %v147 = vadd.f32 0.0, %v146
    %v148 = vpop.f32.mrb[0].mxu0
    %v149 = vpop.f32.mrb[0].mxu0
    %v150 = vpop.f32.mrb[0].mxu0
    %151 = vdwg.mxu0
    %v152 = vmul.f32 %v147, %v102
    %v153 = vld [vmem:[%s3] sm:$0xff]
    %v154 = vld [vmem:[#allocation2] sm:$0xff]
    %v155 = vld [vmem:[#allocation2 + $0x8] sm:$0xff]
    %v156 = vld [vmem:[#allocation2 + $0x10] sm:$0xff]
    %v157 = vld [vmem:[#allocation2 + $0x18] sm:$0xff]
    %v158 = vld [vmem:[#allocation5] sm:$0xff]
    %v159 = vld [vmem:[#allocation5 + $0x8] sm:$0xff]
    %v160 = vld [vmem:[#allocation5 + $0x10] sm:$0xff]
    %v161 = vld [vmem:[#allocation5 + $0x18] sm:$0xff]
    %vm162 = vcmask 261120
    %v164 = vsel %vm162, %v152, 0
    %166 = vmatprep.subr.mxu0 0.0
    %167 = vmatpush1.msra.mxu0 %v158
    %168 = vmatprep.subr.mxu0 0.0
    %169 = vmatpush1.msra.mxu0 %v159
    %170 = vmatprep.subr.mxu0 0.0
    %171 = vmatpush1.msra.mxu0 %v160
    %172 = vmatprep.subr.mxu0 0.0
    %173 = vmatpush1.msra.mxu0 %v161
    %174 = vmatprep.subr.mxu0 0.0
    %175 = vmatpush1.msra.mxu0 0.0
    %176 = vmatprep.subr.mxu0 0.0
    %177 = vmatpush1.msra.mxu0 0.0
    %178 = vmatprep.subr.mxu0 0.0
    %179 = vmatpush1.msra.mxu0 0.0
    %180 = vmatprep.subr.mxu0 0.0
    %181 = vmatpush1.msra.mxu0 0.0
    %182 = vmatprep.subr.mxu0 0.0
    %183 = vmatpush1.msra.mxu0 0.0
    %184 = vmatprep.subr.mxu0 0.0
    %185 = vmatpush1.msra.mxu0 0.0
    %186 = vmatprep.subr.mxu0 0.0
    %187 = vmatpush1.msra.mxu0 0.0
    %188 = vmatprep.subr.mxu0 0.0
    %189 = vmatpush1.msra.mxu0 0.0
    %190 = vmatprep.subr.mxu0 0.0
    %191 = vmatpush1.msra.mxu0 0.0
    %192 = vmatprep.subr.mxu0 0.0
    %193 = vmatpush1.msra.mxu0 0.0
    %194 = vmatprep.subr.mxu0 0.0
    %195 = vmatpush1.msra.mxu0 0.0
    %196 = vmatprep.subr.mxu0 0.0
    %197 = vmatpush1.msra.mxu0 0.0
    %198 = vmatprep.subr.mxu0 0.0
    %199 = vmatpush1.msra.mxu0 0.0
    %200 = vmatprep.subr.mxu0 0.0
    %201 = vmatpush1.msra.mxu0 0.0
    %202 = vmatprep.subr.mxu0 0.0
    %203 = vmatpush1.msra.mxu0 0.0
    %204 = vmatprep.subr.mxu0 0.0
    %205 = vmatpush1.msra.mxu0 0.0
    %206 = vmatprep.subr.mxu0 0.0
    %207 = vmatpush1.msra.mxu0 0.0
    %208 = vmatprep.subr.mxu0 0.0
    %209 = vmatpush1.msra.mxu0 0.0
    %210 = vmatprep.subr.mxu0 0.0
    %211 = vmatpush1.msra.mxu0 0.0
    %212 = vmatprep.subr.mxu0 0.0
    %213 = vmatpush1.msra.mxu0 0.0
    %214 = vmatprep.subr.mxu0 0.0
    %215 = vmatpush1.msra.mxu0 0.0
    %216 = vmatprep.subr.mxu0 0.0
    %217 = vmatpush1.msra.mxu0 0.0
    %218 = vmatprep.subr.mxu0 0.0
    %219 = vmatpush1.msra.mxu0 0.0
    %220 = vmatprep.subr.mxu0 0.0
    %221 = vmatpush1.msra.mxu0 0.0
    %222 = vmatprep.subr.mxu0 0.0
    %223 = vmatpush1.msra.mxu0 0.0
    %224 = vmatprep.subr.mxu0 0.0
    %225 = vmatpush1.msra.mxu0 0.0
    %226 = vmatprep.subr.mxu0 0.0
    %227 = vmatpush1.msra.mxu0 0.0
    %228 = vmatprep.subr.mxu0 0.0
    %229 = vmatpush1.msra.mxu0 0.0
    %230 = vmatprep.mubr.f32.mxu0 0.0
    %231 = vmatmul.mubr.f32.gmra.mrb[0].mxu0 %v164
    %v232 = vpop.f32.mrb[0].mxu0
    %v233 = vadd.f32 0.0, %v232
    %v234 = vpop.f32.mrb[0].mxu0
    %235 = vdwg.mxu0
    %v237 = vsel %vm162, %v153, 0
    %239 = vmatprep.subr.mxu0 0.0
    %240 = vmatpush1.msra.mxu0 %v154
    %241 = vmatprep.subr.mxu0 0.0
    %242 = vmatpush1.msra.mxu0 %v155
    %243 = vmatprep.subr.mxu0 0.0
    %244 = vmatpush1.msra.mxu0 %v156
    %245 = vmatprep.subr.mxu0 0.0
    %246 = vmatpush1.msra.mxu0 %v157
    %247 = vmatprep.subr.mxu0 0.0
    %248 = vmatpush1.msra.mxu0 0.0
    %249 = vmatprep.subr.mxu0 0.0
    %250 = vmatpush1.msra.mxu0 0.0
    %251 = vmatprep.subr.mxu0 0.0
    %252 = vmatpush1.msra.mxu0 0.0
    %253 = vmatprep.subr.mxu0 0.0
    %254 = vmatpush1.msra.mxu0 0.0
    %255 = vmatprep.subr.mxu0 0.0
    %256 = vmatpush1.msra.mxu0 0.0
    %257 = vmatprep.subr.mxu0 0.0
    %258 = vmatpush1.msra.mxu0 0.0
    %259 = vmatprep.subr.mxu0 0.0
    %260 = vmatpush1.msra.mxu0 0.0
    %261 = vmatprep.subr.mxu0 0.0
    %262 = vmatpush1.msra.mxu0 0.0
    %263 = vmatprep.subr.mxu0 0.0
    %264 = vmatpush1.msra.mxu0 0.0
    %265 = vmatprep.subr.mxu0 0.0
    %266 = vmatpush1.msra.mxu0 0.0
    %267 = vmatprep.subr.mxu0 0.0
    %268 = vmatpush1.msra.mxu0 0.0
    %269 = vmatprep.subr.mxu0 0.0
    %270 = vmatpush1.msra.mxu0 0.0
    %271 = vmatprep.subr.mxu0 0.0
    %272 = vmatpush1.msra.mxu0 0.0
    %273 = vmatprep.subr.mxu0 0.0
    %274 = vmatpush1.msra.mxu0 0.0
    %275 = vmatprep.subr.mxu0 0.0
    %276 = vmatpush1.msra.mxu0 0.0
    %277 = vmatprep.subr.mxu0 0.0
    %278 = vmatpush1.msra.mxu0 0.0
    %279 = vmatprep.subr.mxu0 0.0
    %280 = vmatpush1.msra.mxu0 0.0
    %281 = vmatprep.subr.mxu0 0.0
    %282 = vmatpush1.msra.mxu0 0.0
    %283 = vmatprep.subr.mxu0 0.0
    %284 = vmatpush1.msra.mxu0 0.0
    %285 = vmatprep.subr.mxu0 0.0
    %286 = vmatpush1.msra.mxu0 0.0
    %287 = vmatprep.subr.mxu0 0.0
    %288 = vmatpush1.msra.mxu0 0.0
    %289 = vmatprep.subr.mxu0 0.0
    %290 = vmatpush1.msra.mxu0 0.0
    %291 = vmatprep.subr.mxu0 0.0
    %292 = vmatpush1.msra.mxu0 0.0
    %293 = vmatprep.subr.mxu0 0.0
    %294 = vmatpush1.msra.mxu0 0.0
    %295 = vmatprep.subr.mxu0 0.0
    %296 = vmatpush1.msra.mxu0 0.0
    %297 = vmatprep.subr.mxu0 0.0
    %298 = vmatpush1.msra.mxu0 0.0
    %299 = vmatprep.subr.mxu0 0.0
    %300 = vmatpush1.msra.mxu0 0.0
    %301 = vmatprep.subr.mxu0 0.0
    %302 = vmatpush1.msra.mxu0 0.0
    %303 = vmatprep.mubr.f32.mxu0 0.0
    %304 = vmatmul.mubr.f32.gmra.mrb[0].mxu0 %v237
    %v305 = vpop.f32.mrb[0].mxu0
    %v306 = vadd.f32 %v233, %v305
    %v307 = vpop.f32.mrb[0].mxu0
    %308 = vdwg.mxu0
    %v309 = vld [vmem:[%s7] sm:$0x1]
    %v311 = vlaneseq
    %v312 = vshrl.u32 %v311, 7
    %v313 = vsub.s32 0, %v312
    %v314 = vrot.slane %v309, %v313
    %v316 = vadd.f32 %v306, %v314
    %v317 = vmax.f32 %v316, 0.0
    %318 = vst.msk [vmem:[#allocation7] sm:$0xff] %vm162, %v317
    // Predicated region
    $region42: #{tpu_custom_call.1} parent=1 // pred_check
      _
    $region43: #{tpu_custom_call.1} parent=1 // pred_check_branch
      %320 = sbr.rel (0) target = $region45
    $region44: #{tpu_custom_call.1} parent=1 // pred_region
      %s322 = ssub.s32 128, 128
      %323 = vsyncadd [#allocation4], %s322
      %s325 = sshll.u32 [#allocation7], 4
      %s326 = int_to_ptr.vmem [resolvable:$true] %s325
      %328 = dma.vmem_to_hbm [thread:$0]  %s326, 128, %s8, [#allocation4]
    $region45: #{tpu_custom_call.1} parent=1 // pred_fallthru
      _
    // Predicated region
    $region46: #{tpu_custom_call.1} parent=1 // pred_check
      _
    $region47: #{tpu_custom_call.1} parent=1 // pred_check_branch
      %330 = sbr.rel (0) target = $region49
    $region48: #{tpu_custom_call.1} parent=1 // pred_region
      %331 = dma.done [#allocation4], 128
    $region49: #{tpu_custom_call.1} parent=1 // pred_fallthru
      _
    %332 = vsyncpa [#allocation3], 1
    %333 = vsyncpa [#allocation6], 1
    %334 = vsyncpa [#allocation4], 1

</llo_original>
